<compile_context>
chip_gen: v5e
topology: v5e:2x2
jax: 0.10.0
libtpu: 0.0.40
codegen_flags: <defaults>
</compile_context>

<pallas_src>
import functools

import jax
import jax.numpy as jnp
from jax.experimental import pallas as pl
from jax.experimental.pallas import tpu as pltpu

_LANE = 128
_SUBLANE = 8
_MIN_CHUNK = _LANE * _SUBLANE          # 1024 anchors -> one (8, 128) f32 tile
_MAX_CHUNK = 262144                    # 256k anchors/step (~5 MiB of inputs)
_VMEM_LIMIT = 32 * 1024 * 1024


def _smooth_l1(diff, sigma, inv_sigma):
    return jnp.where(diff < inv_sigma,
                     (0.5 * sigma) * diff * diff,
                     diff - 0.5 * inv_sigma)


def _per_anchor_loss(true_ref, pred_ref, sigma, inv_sigma):
    """Returns (positive-mask, per-anchor smooth-L1) as (T, 128) arrays."""
    cls = true_ref[0].astype(jnp.float32)                                # (T, 128)
    dy = jnp.abs(true_ref[1].astype(jnp.float32) - pred_ref[0].astype(jnp.float32))
    dh = jnp.abs(true_ref[2].astype(jnp.float32) - pred_ref[1].astype(jnp.float32))
    per_anchor = _smooth_l1(dy, sigma, inv_sigma) + _smooth_l1(dh, sigma, inv_sigma)
    return cls == 1.0, per_anchor


def _rpn_regr_loss_single_kernel(true_ref, pred_ref, out_ref, *, sigma):
    """Single grid step: no scratch, no init/finalize branches."""
    inv_sigma = 1.0 / sigma
    pos, per_anchor = _per_anchor_loss(true_ref, pred_ref, sigma, inv_sigma)
    total = jnp.sum(jnp.where(pos, per_anchor, 0.0))
    cnt = jnp.sum(jnp.where(pos, 1.0, 0.0))
    loss = jnp.where(cnt > 0.0, total / jnp.maximum(cnt, 1.0), 0.0)
    out_ref[...] = jnp.reshape(loss, (1, 1)).astype(out_ref.dtype)


def _rpn_regr_loss_grid_kernel(true_ref, pred_ref, out_ref, sum_acc, cnt_acc, *, sigma):
    """Multi-step fallback for very large K: tiny (1, 128) accumulators."""
    i = pl.program_id(0)

    @pl.when(i == 0)
    def _init():
        sum_acc[...] = jnp.zeros_like(sum_acc)
        cnt_acc[...] = jnp.zeros_like(cnt_acc)

    inv_sigma = 1.0 / sigma
    pos, per_anchor = _per_anchor_loss(true_ref, pred_ref, sigma, inv_sigma)

    # Sublane reduce inside the step (XLU slot) -> (1, 128) partials; the single
    # cross-lane reduction to a scalar happens once, in the finalize branch.
    sum_acc[...] += jnp.sum(jnp.where(pos, per_anchor, 0.0), axis=0, keepdims=True)
    cnt_acc[...] += jnp.sum(jnp.where(pos, 1.0, 0.0), axis=0, keepdims=True)

    @pl.when(i == pl.num_programs(0) - 1)
    def _finalize():
        total = jnp.sum(sum_acc[...])
        cnt = jnp.sum(cnt_acc[...])
        loss = jnp.where(cnt > 0.0, total / jnp.maximum(cnt, 1.0), 0.0)
        out_ref[...] = jnp.reshape(loss, (1, 1)).astype(out_ref.dtype)


def rpn_regr_loss(y_pred, y_true, *, sigma=9.0):
    """y_pred: (1, K, >=2), y_true: (1, K, >=3) with channel 0 = cls, 1:3 = regr.

    Returns the scalar smooth-L1 RPN regression loss (f32).
    """
    assert y_pred.ndim == 3 and y_true.ndim == 3
    assert y_true.shape[2] >= 3 and y_pred.shape[2] >= 2
    assert y_true.shape[1] == y_pred.shape[1]
    K = y_true.shape[1]

    # --- Step / padding geometry -------------------------------------------
    kp = pl.cdiv(K, _LANE) * _LANE          # pad only to the 128-lane boundary
    if kp <= _MAX_CHUNK:
        n_steps = 1
        chunk = kp                          # single grid step (common case)
    else:
        n_steps = pl.cdiv(kp, _MAX_CHUNK)
        chunk = pl.cdiv(pl.cdiv(kp, n_steps), _MIN_CHUNK) * _MIN_CHUNK
        kp = n_steps * chunk                # residual pad < 1024*(n_steps-1)
    pad = kp - K

    # --- Layout plumbing (small; XLA may fuse it into the kernel's input DMA
    # via allow_input_fusion): batch-0 slice, channel slice, pad, channel-major
    # transpose, anchors onto the 128-lane axis. -----------------------------
    true2d = y_true[0]
    pred2d = y_pred[0]
    if true2d.shape[-1] != 3:
        true2d = true2d[:, :3]              # (K, 3): cls, dy, dh
    if pred2d.shape[-1] != 2:
        pred2d = pred2d[:, :2]              # (K, 2): dy, dh
    if pad:
        # Padded cls == 0.0 -> excluded by the cls == 1.0 test in the kernel.
        true2d = jnp.pad(true2d, ((0, pad), (0, 0)))
        pred2d = jnp.pad(pred2d, ((0, pad), (0, 0)))

    rows = kp // _LANE
    tile_rows = chunk // _LANE
    true3d = true2d.T.reshape(3, rows, _LANE)
    pred3d = pred2d.T.reshape(2, rows, _LANE)

    # --- Kernel selection ----------------------------------------------------
    if n_steps == 1:
        kernel = functools.partial(_rpn_regr_loss_single_kernel, sigma=float(sigma))
        scratch = []
    else:
        kernel = functools.partial(_rpn_regr_loss_grid_kernel, sigma=float(sigma))
        scratch = [pltpu.VMEM((1, _LANE), jnp.float32),   # masked-loss partials
                   pltpu.VMEM((1, _LANE), jnp.float32)]   # positive-count partials

    bytes_accessed = int(true3d.size * jnp.dtype(true3d.dtype).itemsize
                         + pred3d.size * jnp.dtype(pred3d.dtype).itemsize + 4)
    cost = pl.CostEstimate(flops=int(14 * kp), transcendentals=0,
                           bytes_accessed=bytes_accessed)

    out = pl.pallas_call(
        kernel,
        out_shape=jax.ShapeDtypeStruct((1, 1), jnp.float32),
        grid_spec=pltpu.PrefetchScalarGridSpec(
            num_scalar_prefetch=0,
            grid=(n_steps,),
            in_specs=[
                pl.BlockSpec((3, tile_rows, _LANE), lambda i: (0, i, 0)),
                pl.BlockSpec((2, tile_rows, _LANE), lambda i: (0, i, 0)),
            ],
            out_specs=pl.BlockSpec((1, 1), lambda i: (0, 0)),
            scratch_shapes=scratch,
        ),
        compiler_params=pltpu.CompilerParams(
            dimension_semantics=("arbitrary",),
            vmem_limit_bytes=_VMEM_LIMIT,
            allow_input_fusion=[True, True],
        ),
        cost_estimate=cost,
    )(true3d, pred3d)
    return out[0, 0]


def _reference_loss(y_pred, y_true, sigma=9.0):
    """Pure-JAX reference replicating the PyTorch forward."""
    cls = y_true[0, :, 0].astype(jnp.float32)
    regr = y_true[0, :, 1:3].astype(jnp.float32)
    pred = y_pred[0, :, :2].astype(jnp.float32)
    mask = (cls == 1.0).astype(jnp.float32)[:, None]
    diff = jnp.abs(regr - pred)
    less_one = (diff < 1.0 / sigma).astype(jnp.float32)
    l = less_one * 0.5 * diff ** 2 * sigma + (1.0 - less_one) * (diff - 0.5 / sigma)
    per_row = jnp.sum(l, axis=1, keepdims=True)
    cnt = jnp.sum(mask)
    return jnp.where(cnt > 0, jnp.sum(per_row * mask) / jnp.maximum(cnt, 1.0), 0.0)


if __name__ == "__main__":
    key = jax.random.PRNGKey(0)
    k1, k2, k3 = jax.random.split(key, 3)

    K = 256  # number of anchors (small demo size)

    # Predictions: (1, K, 2)
    y_pred = jax.random.normal(k1, (1, K, 2), dtype=jnp.float32)

    # Targets: (1, K, 3) -> channel 0 is cls in {-1, 0, 1}, channels 1:3 regr.
    cls_vals = jax.random.randint(k2, (1, K, 1), minval=-1, maxval=2).astype(jnp.float32)
    regr_vals = jax.random.normal(k3, (1, K, 2), dtype=jnp.float32)
    y_true = jnp.concatenate([cls_vals, regr_vals], axis=-1)

    loss = rpn_regr_loss(y_pred, y_true, sigma=9.0)
    loss = jax.block_until_ready(loss)

    ref = jax.block_until_ready(_reference_loss(y_pred, y_true, sigma=9.0))
    assert jnp.allclose(loss, ref, rtol=1e-5, atol=1e-5), (loss, ref)

    print("KERNEL_OK")
</pallas_src>

<mosaic_0001>
module attributes {stable_mosaic.version = 11 : i64} {
  func.func @_rpn_regr_loss_single_kernel(%arg0: i32, %arg1: memref<3x2x128xf32, #tpu.memory_space<vmem>>, %arg2: memref<2x2x128xf32, #tpu.memory_space<vmem>>, %arg3: memref<1x1xf32, #tpu.memory_space<vmem>>) attributes {dimension_semantics = [#tpu.dimension_semantics<arbitrary>], iteration_bounds = array<i64: 1>, scalar_prefetch = 0 : i64, scratch_operands = 0 : i64, tpu.core_type = #tpu.core_type<tc>, window_params = [{transform_indices = @transform_0, window_bounds = array<i64: 3, 2, 128>}, {transform_indices = @transform_1, window_bounds = array<i64: 2, 2, 128>}, {pipeline_mode = #tpu.pipeline_mode<synchronous>, transform_indices = @transform_2, window_bounds = array<i64: 1, 1>}]} {
    %c0 = arith.constant 0 : index
    %c0_0 = arith.constant 0 : index
    %c0_1 = arith.constant 0 : index
    %0 = vector.load %arg1[%c0, %c0_0, %c0_1] : memref<3x2x128xf32, #tpu.memory_space<vmem>>, vector<1x2x128xf32>
    %1 = vector.shape_cast %0 : vector<1x2x128xf32> to vector<2x128xf32>
    %c1 = arith.constant 1 : index
    %c0_2 = arith.constant 0 : index
    %c0_3 = arith.constant 0 : index
    %2 = vector.load %arg1[%c1, %c0_2, %c0_3] : memref<3x2x128xf32, #tpu.memory_space<vmem>>, vector<1x2x128xf32>
    %3 = vector.shape_cast %2 : vector<1x2x128xf32> to vector<2x128xf32>
    %c0_4 = arith.constant 0 : index
    %c0_5 = arith.constant 0 : index
    %c0_6 = arith.constant 0 : index
    %4 = vector.load %arg2[%c0_4, %c0_5, %c0_6] : memref<2x2x128xf32, #tpu.memory_space<vmem>>, vector<1x2x128xf32>
    %5 = vector.shape_cast %4 : vector<1x2x128xf32> to vector<2x128xf32>
    %6 = arith.subf %3, %5 : vector<2x128xf32>
    %7 = math.absf %6 : vector<2x128xf32>
    %c2 = arith.constant 2 : index
    %c0_7 = arith.constant 0 : index
    %c0_8 = arith.constant 0 : index
    %8 = vector.load %arg1[%c2, %c0_7, %c0_8] : memref<3x2x128xf32, #tpu.memory_space<vmem>>, vector<1x2x128xf32>
    %9 = vector.shape_cast %8 : vector<1x2x128xf32> to vector<2x128xf32>
    %c1_9 = arith.constant 1 : index
    %c0_10 = arith.constant 0 : index
    %c0_11 = arith.constant 0 : index
    %10 = vector.load %arg2[%c1_9, %c0_10, %c0_11] : memref<2x2x128xf32, #tpu.memory_space<vmem>>, vector<1x2x128xf32>
    %11 = vector.shape_cast %10 : vector<1x2x128xf32> to vector<2x128xf32>
    %12 = arith.subf %9, %11 : vector<2x128xf32>
    %13 = math.absf %12 : vector<2x128xf32>
    %cst = arith.constant 0.111111112 : f32
    %14 = vector.broadcast %cst : f32 to vector<2x128xf32>
    %15 = arith.cmpf olt, %7, %14 : vector<2x128xf32>
    %cst_12 = arith.constant 4.500000e+00 : f32
    %16 = vector.broadcast %cst_12 : f32 to vector<2x128xf32>
    %17 = arith.mulf %16, %7 : vector<2x128xf32>
    %18 = arith.mulf %17, %7 : vector<2x128xf32>
    %cst_13 = arith.constant 0.055555556 : f32
    %19 = vector.broadcast %cst_13 : f32 to vector<2x128xf32>
    %20 = arith.subf %7, %19 : vector<2x128xf32>
    %21 = arith.select %15, %18, %20 : vector<2x128xi1>, vector<2x128xf32>
    %cst_14 = arith.constant 0.111111112 : f32
    %22 = vector.broadcast %cst_14 : f32 to vector<2x128xf32>
    %23 = arith.cmpf olt, %13, %22 : vector<2x128xf32>
    %cst_15 = arith.constant 4.500000e+00 : f32
    %24 = vector.broadcast %cst_15 : f32 to vector<2x128xf32>
    %25 = arith.mulf %24, %13 : vector<2x128xf32>
    %26 = arith.mulf %25, %13 : vector<2x128xf32>
    %cst_16 = arith.constant 0.055555556 : f32
    %27 = vector.broadcast %cst_16 : f32 to vector<2x128xf32>
    %28 = arith.subf %13, %27 : vector<2x128xf32>
    %29 = arith.select %23, %26, %28 : vector<2x128xi1>, vector<2x128xf32>
    %30 = arith.addf %21, %29 : vector<2x128xf32>
    %cst_17 = arith.constant 1.000000e+00 : f32
    %31 = vector.broadcast %cst_17 : f32 to vector<2x128xf32>
    %32 = arith.cmpf oeq, %1, %31 : vector<2x128xf32>
    %cst_18 = arith.constant 0.000000e+00 : f32
    %33 = vector.broadcast %cst_18 : f32 to vector<2x128xf32>
    %34 = arith.select %32, %30, %33 : vector<2x128xi1>, vector<2x128xf32>
    %35 = vector.shape_cast %34 : vector<2x128xf32> to vector<1x2x128xf32>
    %cst_19 = arith.constant dense<0.000000e+00> : vector<1xf32>
    %36 = vector.multi_reduction <add>, %35, %cst_19 [1, 2] : vector<1x2x128xf32> to vector<1xf32>
    %37 = vector.shape_cast %36 : vector<1xf32> to vector<1x1x1xf32>
    %38 = vector.extract %37[0, 0, 0] : f32 from vector<1x1x1xf32>
    %cst_20 = arith.constant 1.000000e+00 : f32
    %cst_21 = arith.constant 0.000000e+00 : f32
    %39 = vector.broadcast %cst_20 : f32 to vector<2x128xf32>
    %40 = vector.broadcast %cst_21 : f32 to vector<2x128xf32>
    %41 = arith.select %32, %39, %40 : vector<2x128xi1>, vector<2x128xf32>
    %42 = vector.shape_cast %41 : vector<2x128xf32> to vector<1x2x128xf32>
    %cst_22 = arith.constant dense<0.000000e+00> : vector<1xf32>
    %43 = vector.multi_reduction <add>, %42, %cst_22 [1, 2] : vector<1x2x128xf32> to vector<1xf32>
    %44 = vector.shape_cast %43 : vector<1xf32> to vector<1x1x1xf32>
    %45 = vector.extract %44[0, 0, 0] : f32 from vector<1x1x1xf32>
    %cst_23 = arith.constant 0.000000e+00 : f32
    %46 = arith.cmpf ogt, %45, %cst_23 : f32
    %cst_24 = arith.constant 1.000000e+00 : f32
    %47 = arith.maximumf %45, %cst_24 : f32
    %48 = arith.divf %38, %47 : f32
    %cst_25 = arith.constant 0.000000e+00 : f32
    %49 = arith.select %46, %48, %cst_25 : f32
    %50 = vector.broadcast %49 : f32 to vector<1x1xf32>
    %c0_26 = arith.constant 0 : index
    %c0_27 = arith.constant 0 : index
    %51 = vector.load %arg3[%c0_26, %c0_27] : memref<1x1xf32, #tpu.memory_space<vmem>>, vector<1x1xf32>
    tpu.vector_store %arg3[%c0_26, %c0_27], %50 {strides = array<i32>} : memref<1x1xf32, #tpu.memory_space<vmem>>, vector<1x1xf32>,
    return
  }
  func.func @transform_0(%arg0: i32) -> (i32, i32, i32) {
    %c0_i32 = arith.constant 0 : i32
    %c0_i32_0 = arith.constant 0 : i32
    %c0_i32_1 = arith.constant 0 : i32
    return %c0_i32, %arg0, %c0_i32_0 : i32, i32, i32
  }
  func.func @transform_1(%arg0: i32) -> (i32, i32, i32) {
    %c0_i32 = arith.constant 0 : i32
    %c0_i32_0 = arith.constant 0 : i32
    %c0_i32_1 = arith.constant 0 : i32
    return %c0_i32, %arg0, %c0_i32_0 : i32, i32, i32
  }
  func.func @transform_2(%arg0: i32) -> (i32, i32) {
    %c0_i32 = arith.constant 0 : i32
    %c0_i32_0 = arith.constant 0 : i32
    %c0_i32_1 = arith.constant 0 : i32
    return %c0_i32, %c0_i32_0 : i32, i32
  }
}

</mosaic_0001>

<llo_original>
// kernel: tpu_custom_call.1
$region0: #{tpu_custom_call.1}
  #allocation0 [shape = 'u32[]', space=smem, size = 0x4, offset = 0x4, fixed_abs, tag = 'smem constant byte address 0x4 - core index']
  #allocation1 [shape = 'u32[72,128]{1,0:T(1,128)}', space=vmem, size = 0x9000, scoped, tag = 'internal scratch']
  %s0 = inlined_call_operand.hbm [shape: f32[3,2,128], index: 0, kind: input, shape index: {}]
  %s1 = inlined_call_operand.hbm [shape: f32[2,2,128], index: 1, kind: input, shape index: {}]
  %s2 = inlined_call_operand.hbm [shape: f32[1,1], index: 2, kind: output, shape index: {}]
  %s3 = sld [smem:[#allocation0]]
  $region26: #{tpu_custom_call.1} parent=0
    _
  %s5 = ssub.s32 1, %s3
  %s6 = scalar_select 0, %s5, %s3
  $region1: #{tpu_custom_call.1} parent=0
    #allocation2 [shape = 'u8[3072]{0}', space=vmem, size = 0xc00, scoped, tag = 'input window, operand 0, single buffered']
    #allocation3 [shape = 's32[1]{0}', space=sflag, size = 0x4, scoped, tag = 'scoped memory for tpu_custom_call.1']
    #allocation4 [shape = 's32[1]{0}', space=sflag, size = 0x4, scoped, tag = 'scoped memory for tpu_custom_call.1']
    #allocation5 [shape = 'u8[2048]{0}', space=vmem, size = 0x800, scoped, tag = 'input window, operand 1, single buffered']
    #allocation6 [shape = 's32[1]{0}', space=sflag, size = 0x4, scoped, tag = 'scoped memory for tpu_custom_call.1']
    #allocation7 [shape = 'u8[512]{0}', space=vmem, size = 0x400, scoped, tag = 'output window, operand 0, single buffered']
    %7 = vsyncpa [#allocation3], 0
    %8 = vsyncpa [#allocation6], 0
    %9 = vsyncpa [#allocation4], 0
    // Predicated region
    $region2: #{tpu_custom_call.1} parent=1 // pred_check
      _
    $region3: #{tpu_custom_call.1} parent=1 // pred_check_branch
      %11 = sbr.rel (0) target = $region5
    $region4: #{tpu_custom_call.1} parent=1 // pred_region
      %13 = vsyncadd [#allocation3], 0
      %s14 = sshll.u32 %s0, 4
      %s15 = int_to_ptr.hbm [resolvable:$true] %s14
      %s16 = sshll.u32 [#allocation2], 4
      %s17 = int_to_ptr.vmem [resolvable:$true] %s16
      %22 = dma.hbm_to_vmem [thread:$0]  %s15, 96, %s17, [#allocation3], 32, 32, 2
    $region5: #{tpu_custom_call.1} parent=1 // pred_fallthru
      _
    // Predicated region
    $region6: #{tpu_custom_call.1} parent=1 // pred_check
      _
    $region7: #{tpu_custom_call.1} parent=1 // pred_check_branch
      %24 = sbr.rel (0) target = $region9
    $region8: #{tpu_custom_call.1} parent=1 // pred_region
      %26 = vsyncadd [#allocation6], 0
      %s27 = sshll.u32 %s1, 4
      %s28 = int_to_ptr.hbm [resolvable:$true] %s27
      %s29 = sshll.u32 [#allocation5], 4
      %s30 = int_to_ptr.vmem [resolvable:$true] %s29
      %35 = dma.hbm_to_vmem [thread:$0]  %s28, 64, %s30, [#allocation6], 32, 32, 2
    $region9: #{tpu_custom_call.1} parent=1 // pred_fallthru
      _
    // Predicated region
    $region10: #{tpu_custom_call.1} parent=1 // pred_check
      _
    $region11: #{tpu_custom_call.1} parent=1 // pred_check_branch
      %37 = sbr.rel (0) target = $region13
    $region12: #{tpu_custom_call.1} parent=1 // pred_region
      %39 = dma.done [#allocation3], 96
    $region13: #{tpu_custom_call.1} parent=1 // pred_fallthru
      _
    // Predicated region
    $region14: #{tpu_custom_call.1} parent=1 // pred_check
      _
    $region15: #{tpu_custom_call.1} parent=1 // pred_check_branch
      %41 = sbr.rel (0) target = $region17
    $region16: #{tpu_custom_call.1} parent=1 // pred_region
      %43 = dma.done [#allocation6], 64
    $region17: #{tpu_custom_call.1} parent=1 // pred_fallthru
      _
    %v44 = vld [vmem:[#allocation2] sm:$0x3]
    %s45 = scalar_lea.vmem [#allocation2], 2
    %v46 = vld [vmem:[%s45] sm:$0x3]
    %v47 = vld [vmem:[#allocation5] sm:$0x3]
    %v48 = vsub.f32 %v46, %v47
    %v49 = vand.u32 2147483647, %v48
    %s50 = scalar_lea.vmem [#allocation2], 4
    %v51 = vld [vmem:[%s50] sm:$0x3]
    %s52 = scalar_lea.vmem [#allocation5], 2
    %v53 = vld [vmem:[%s52] sm:$0x3]
    %v54 = vsub.f32 %v51, %v53
    %v55 = vand.u32 2147483647, %v54
    %vm56 = vcmp.lt.f32.partialorder %v49, 0.11111111
    %v57 = vmul.f32 %v49, 4.5
    %v58 = vmul.f32 %v57, %v49
    %v59 = vsub.f32 %v49, 0.055555556
    %v60 = vsel %vm56, %v58, %v59
    %vm61 = vcmp.lt.f32.partialorder %v55, 0.11111111
    %v62 = vmul.f32 %v55, 4.5
    %v63 = vmul.f32 %v62, %v55
    %v64 = vsub.f32 %v55, 0.055555556
    %v65 = vsel %vm61, %v63, %v64
    %v66 = vadd.f32 %v60, %v65
    %vm67 = vcmp.eq.f32.partialorder %v44, 1.0
    %v68 = vsel %vm67, %v66, 0.0
    %vm69 = vcmask 1041408
    %v70 = vsel %vm69, %v68, 0.0
    %71 = vadd.xlane.f32.xlu0 %v70
    %v72 = vpop.xlane.xlu0 %71
    %v73 = vrot.slane %v72, 4
    %v74 = vadd.f32 %v72, %v73
    %v75 = vrot.slane %v74, 2
    %v76 = vadd.f32 %v74, %v75
    %v77 = vrot.slane %v76, 1
    %v78 = vadd.f32 %v76, %v77
    %s79 = vtos %v78
    %v80 = vsel %vm67, 1.0, 0.0
    %v81 = vsel %vm69, %v80, 0.0
    %82 = vadd.xlane.f32.xlu0 %v81
    %v83 = vpop.xlane.xlu0 %82
    %v84 = vrot.slane %v83, 4
    %v85 = vadd.f32 %v83, %v84
    %v86 = vrot.slane %v85, 2
    %v87 = vadd.f32 %v85, %v86
    %v88 = vrot.slane %v87, 1
    %v89 = vadd.f32 %v87, %v88
    %s90 = vtos %v89
    %p91 = scmp.gt.f32.partialorder %s90, 0.0
    %s92 = smax.f32 %s90, 1.0
    %v93 = vstv %s92
    %v94 = vrcp.pop %v93
    %v95 = vmul.f32 %v93, %v94
    %v96 = vsub.f32 1.0, %v95
    %v97 = vmul.f32 %v94, %v96
    %v98 = vadd.f32 %v94, %v97
    %vm99 = vweird.f32 %v93
    %vm100 = vweird.f32 %v94
    %vm101 = vmor %vm99, %vm100
    %v102 = vsel %vm101, %v94, %v98
    %v103 = vand.u32 2147483647, %v93
    %vm104 = vcmp.eq.f32.partialorder %v103, 8.507059e+37
    %v105 = vand.u32 %v93, 2147483648
    %v106 = vor.u32 1.1754944e-38, %v105
    %v107 = vsel %vm104, %v106, %v102
    %s108 = vtos %v107
    %s109 = smul.f32 %s79, %s108
    %s110 = scalar_select %p91, %s109, 0.0
    %v111 = vstv %s110
    %vm112 = vcmask 0
    %113 = vst.msk [vmem:[#allocation7] sm:$0x1] %vm112, %v111
    // Predicated region
    $region18: #{tpu_custom_call.1} parent=1 // pred_check
      _
    $region19: #{tpu_custom_call.1} parent=1 // pred_check_branch
      %115 = sbr.rel (0) target = $region21
    $region20: #{tpu_custom_call.1} parent=1 // pred_region
      %117 = vsyncadd [#allocation4], 0
      %s119 = sshll.u32 [#allocation7], 4
      %s120 = int_to_ptr.vmem [resolvable:$true] %s119
      %s121 = sshll.u32 %s2, 4
      %s122 = int_to_ptr.hbm [resolvable:$true] %s121
      %124 = dma.vmem_to_hbm [thread:$0]  %s120, 16, %s122, [#allocation4]
    $region21: #{tpu_custom_call.1} parent=1 // pred_fallthru
      _
    // Predicated region
    $region22: #{tpu_custom_call.1} parent=1 // pred_check
      _
    $region23: #{tpu_custom_call.1} parent=1 // pred_check_branch
      %126 = sbr.rel (0) target = $region25
    $region24: #{tpu_custom_call.1} parent=1 // pred_region
      %128 = dma.done [#allocation4], 16
    $region25: #{tpu_custom_call.1} parent=1 // pred_fallthru
      _
    %129 = vsyncpa [#allocation3], 1
    %130 = vsyncpa [#allocation6], 1
    %131 = vsyncpa [#allocation4], 1

</llo_original>
